<compile_context>
chip_gen: v6e
topology: v6e:2x2x1
jax: 0.10.0
libtpu: 0.0.40
codegen_flags: <defaults>
</compile_context>

<pallas_src>
import functools
import math

import jax
import jax.numpy as jnp
from jax import lax
from jax.experimental import pallas as pl
from jax.experimental.pallas import tpu as pltpu


# Safe on v7x (64 MiB VMEM/TC) while still allowing the tile sizes used below on
# v5e / v6e (128 MiB).  Tune upward (64-96 MiB) on v6e/v5e for larger tiles.
_VMEM_LIMIT = 48 * 1024 * 1024


# ----------------------------------------------------------------------------
# Configs (mirrors of the PyTorch config classes, no torch)
# ----------------------------------------------------------------------------
class SiglipVisionConfig:
    def __init__(self, hidden_size=32, intermediate_size=64, num_hidden_layers=2,
                 num_attention_heads=4, num_channels=3, image_size=16, patch_size=8,
                 layer_norm_eps=1e-6, attention_dropout=0.0, **kwargs):
        self.hidden_size = hidden_size
        self.intermediate_size = intermediate_size
        self.num_hidden_layers = num_hidden_layers
        self.num_attention_heads = num_attention_heads
        self.num_channels = num_channels
        self.image_size = image_size
        self.patch_size = patch_size
        self.layer_norm_eps = layer_norm_eps
        self.attention_dropout = attention_dropout


class GemmaConfig:
    def __init__(self, vocab_size, hidden_size, intermediate_size, num_hidden_layers,
                 num_attention_heads, num_key_value_heads, head_dim=256,
                 max_position_embeddings=8192, rms_norm_eps=1e-6, rope_theta=10000.0,
                 attention_bias=False, attention_dropout=0.0, pad_token_id=None, **kwargs):
        self.vocab_size = vocab_size
        self.max_position_embeddings = max_position_embeddings
        self.hidden_size = hidden_size
        self.intermediate_size = intermediate_size
        self.num_hidden_layers = num_hidden_layers
        self.num_attention_heads = num_attention_heads
        self.head_dim = head_dim
        self.num_key_value_heads = num_key_value_heads
        self.rms_norm_eps = rms_norm_eps
        self.rope_theta = rope_theta
        self.attention_bias = attention_bias
        self.attention_dropout = attention_dropout
        self.pad_token_id = pad_token_id


class PaliGemmaConfig:
    def __init__(self, vision_config=None, text_config=None, ignore_index=-100,
                 image_token_index=256000, vocab_size=257152, projection_dim=2048,
                 hidden_size=2048, pad_token_id=None, **kwargs):
        self.ignore_index = ignore_index
        self.image_token_index = image_token_index
        self.vocab_size = vocab_size
        self.projection_dim = projection_dim
        self.hidden_size = hidden_size
        self.is_encoder_decoder = False
        self.pad_token_id = pad_token_id
        self.vision_config = SiglipVisionConfig(**vision_config)
        self.text_config = GemmaConfig(**text_config, pad_token_id=pad_token_id)
        self.vocab_size = self.text_config.vocab_size
        self.text_config.num_image_tokens = (
            self.vision_config.image_size // self.vision_config.patch_size) ** 2
        self.vision_config.projection_dim = projection_dim


# ----------------------------------------------------------------------------
# Tiling / padding helpers
# ----------------------------------------------------------------------------
def _round_up(x, m):
    return ((x + m - 1) // m) * m


def _pick_tile(dim, target, align):
    """Largest aligned divisor of dim <= target, else whole dim (for seq axes,
    where zero-padding would change softmax results)."""
    if dim <= target:
        return dim
    t = (target // align) * align
    while t >= align:
        if dim % t == 0:
            return t
        t -= align
    # TODO(synk): masked edge tiles for ragged sequence lengths.
    return dim


def _tile(dim, target, align):
    """Tile selection for matmul axes: returns (tile, padded_dim).

    If the axis has no well-sized aligned divisor (e.g. vocab 257152, SigLIP
    intermediate 4304) the axis is zero-padded to a tile multiple instead of
    silently falling back to a tiny (tn=128) or full-dimension tile.
    """
    if dim <= target:
        return dim, dim
    t_max = max(align, (target // align) * align)
    t = t_max
    while t >= max(align, t_max // 2):
        if dim % t == 0:
            return t, dim
        t -= align
    return t_max, _round_up(dim, t_max)


def _pad2(a, rows, cols):
    r, c = a.shape
    if r == rows and c == cols:
        return a
    return jnp.pad(a, ((0, rows - r), (0, cols - c)))


def _gelu_tanh(x):
    # gelu(approximate="tanh") as used by SigLIP / Gemma MLPs (f32 math, EUP tanh)
    return 0.5 * x * (1.0 + jnp.tanh(0.7978845608028654 * (x + 0.044715 * x * x * x)))


# ----------------------------------------------------------------------------
# Fused linear kernel: [cached norm prologue] -> tiled matmul (bf16 MXU, f32 acc)
#                      -> [bias] -> [gelu] -> [residual] epilogue
# ----------------------------------------------------------------------------
def _fused_linear_kernel(*refs, has_bias, norm, activation, add_residual, eps, single_k):
    it = iter(refs)
    x_ref = next(it)
    w_ref = next(it)
    b_ref = next(it) if has_bias else None
    nw_ref = next(it) if norm is not None else None
    nb_ref = next(it) if norm == "layer" else None
    r_ref = next(it) if add_residual else None
    o_ref = next(it)
    xn_ref = next(it) if norm is not None else None
    acc_ref = None if single_k else next(it)

    if norm is not None:
        # The normalized activation depends only on the row block (i).  Compute it
        # once per row block -- at the first output tile -- and reuse the cached
        # bf16 result for every N tile (j axis is "arbitrary", so a megacore shard
        # never starts mid-row).
        @pl.when(pl.program_id(1) == 0)
        def _compute_norm():
            x = x_ref[...].astype(jnp.float32)
            if norm == "rms":
                var = jnp.mean(x * x, axis=-1, keepdims=True)
                xn = x * lax.rsqrt(var + eps) * (1.0 + nw_ref[...].astype(jnp.float32))
            else:  # layer norm
                mean = jnp.mean(x, axis=-1, keepdims=True)
                xc = x - mean
                var = jnp.mean(xc * xc, axis=-1, keepdims=True)
                xn = (xc * lax.rsqrt(var + eps) * nw_ref[...].astype(jnp.float32)
                      + nb_ref[...].astype(jnp.float32))
            xn_ref[...] = xn.astype(jnp.bfloat16)

        lhs = xn_ref[...]
    else:
        lhs = x_ref[...].astype(jnp.bfloat16)

    def _epilogue(y):
        if has_bias:
            y = y + b_ref[...].astype(jnp.float32)
        if activation == "gelu_tanh":
            y = _gelu_tanh(y)
        if add_residual:
            y = y + r_ref[...].astype(jnp.float32)
        o_ref[...] = y.astype(o_ref.dtype)

    if single_k:
        # Single K step: no f32 accumulator round-trip through VMEM (v5e vst slot).
        _epilogue(jnp.dot(lhs, w_ref[...], preferred_element_type=jnp.float32))
    else:
        @pl.when(pl.program_id(2) == 0)
        def _init():
            acc_ref[...] = jnp.zeros_like(acc_ref)

        acc_ref[...] += jnp.dot(lhs, w_ref[...], preferred_element_type=jnp.float32)

        @pl.when(pl.program_id(2) == pl.num_programs(2) - 1)
        def _finalize():
            _epilogue(acc_ref[...])


def fused_linear(x, w, b=None, *, norm=None, norm_w=None, norm_b=None,
                 residual=None, activation=None, eps=1e-6, out_dtype=jnp.bfloat16,
                 tm_target=256, tn_target=512, tk_target=1024):
    """x: [..., K]; w: [K, N] (pre-transposed, bf16, lane-dense output)."""
    lead = x.shape[:-1]
    K = x.shape[-1]
    N = w.shape[1]
    M = math.prod(lead)
    x2 = x.reshape(M, K)

    tm, M_pad = _tile(M, tm_target, 16)       # bf16 sublane packing: 16-row alignment
    tn, N_pad = _tile(N, tn_target, 128)
    if norm is not None:
        # Norm statistics need the whole K row, so the reduction axis stays untiled
        # (K == hidden size, small enough for VMEM) -> exactly one K step.
        tk, K_pad = K, K
    else:
        tk, K_pad = _tile(K, tk_target, 128)
    single_k = (K_pad // tk) == 1

    # TODO(synk): for real model dims pre-pad the weights once at init instead of here.
    x2 = _pad2(x2, M_pad, K_pad)
    w2 = _pad2(w, K_pad, N_pad)

    grid = (M_pad // tm, N_pad // tn, K_pad // tk)

    in_specs = [pl.BlockSpec((tm, tk), lambda i, j, k: (i, k)),
                pl.BlockSpec((tk, tn), lambda i, j, k: (k, j))]
    args = [x2, w2]
    if b is not None:
        in_specs.append(pl.BlockSpec((1, tn), lambda i, j, k: (0, j)))
        args.append(_pad2(b.reshape(1, N), 1, N_pad))
    if norm is not None:
        in_specs.append(pl.BlockSpec((1, tk), lambda i, j, k: (0, k)))
        args.append(norm_w.reshape(1, K))
    if norm == "layer":
        in_specs.append(pl.BlockSpec((1, tk), lambda i, j, k: (0, k)))
        args.append(norm_b.reshape(1, K))
    if residual is not None:
        in_specs.append(pl.BlockSpec((tm, tn), lambda i, j, k: (i, j)))
        args.append(_pad2(residual.reshape(M, N), M_pad, N_pad))

    scratch = []
    if norm is not None:
        scratch.append(pltpu.VMEM((tm, K_pad), jnp.bfloat16))   # cached normalized rows
    if not single_k:
        scratch.append(pltpu.VMEM((tm, tn), jnp.float32))

    # The cached-norm path makes the j axis order-dependent (j==0 writes the cache),
    # so it must stay sequential; otherwise both output axes are parallel.
    dims = (("parallel", "arbitrary", "arbitrary") if norm is not None
            else ("parallel", "parallel", "arbitrary"))

    out = pl.pallas_call(
        functools.partial(_fused_linear_kernel, has_bias=b is not None, norm=norm,
                          activation=activation, add_residual=residual is not None,
                          eps=eps, single_k=single_k),
        grid=grid,
        in_specs=in_specs,
        out_specs=pl.BlockSpec((tm, tn), lambda i, j, k: (i, j)),
        out_shape=jax.ShapeDtypeStruct((M_pad, N_pad), out_dtype),
        scratch_shapes=scratch,
        compiler_params=pltpu.CompilerParams(dimension_semantics=dims,
                                             vmem_limit_bytes=_VMEM_LIMIT),
    )(*args)
    if (M_pad, N_pad) != (M, N):
        out = out[:M, :N]
    return out.reshape(lead + (N,))


# ----------------------------------------------------------------------------
# Gemma MLP kernel: cached RMSNorm + gate/up/down tiled over the intermediate
# dimension, partial down-projection accumulated in VMEM, residual taken from
# the (resident) x block itself.
# ----------------------------------------------------------------------------
def _gemma_mlp_kernel(x_ref, nw_ref, wg_ref, wu_ref, wd_ref, o_ref, xn_ref, acc_ref, *, eps):
    c = pl.program_id(1)

    @pl.when(c == 0)
    def _init():
        x = x_ref[...].astype(jnp.float32)
        var = jnp.mean(x * x, axis=-1, keepdims=True)
        xn_ref[...] = (x * lax.rsqrt(var + eps)
                       * (1.0 + nw_ref[...].astype(jnp.float32))).astype(jnp.bfloat16)
        acc_ref[...] = jnp.zeros_like(acc_ref)

    xn = xn_ref[...]
    g = jnp.dot(xn, wg_ref[...], preferred_element_type=jnp.float32)
    u = jnp.dot(xn, wu_ref[...], preferred_element_type=jnp.float32)
    hidden = (_gelu_tanh(g) * u).astype(jnp.bfloat16)
    acc_ref[...] += jnp.dot(hidden, wd_ref[...], preferred_element_type=jnp.float32)

    @pl.when(c == pl.num_programs(1) - 1)
    def _finalize():
        # Residual add reuses the resident x block (no duplicate residual input).
        o_ref[...] = (acc_ref[...] + x_ref[...].astype(jnp.float32)).astype(o_ref.dtype)


def gemma_mlp(x, norm_w, wg, wu, wd, eps, *, tm_target=256, ti_target=512):
    B, S, H = x.shape
    M = B * S
    I = wg.shape[1]
    # Aim for >= 2 row blocks when possible so megacore (v7x) can split the only
    # parallel axis of this kernel.
    target_m = tm_target
    if M >= 16:
        target_m = min(target_m, max(8, _round_up(M, 8) // 2))
    tm, M_pad = _tile(M, target_m, 8)
    ti, I_pad = _tile(I, ti_target, 128)

    x2 = _pad2(x.reshape(M, H), M_pad, H)
    wg2 = _pad2(wg, H, I_pad)
    wu2 = _pad2(wu, H, I_pad)
    wd2 = _pad2(wd, I_pad, H)   # zero wd rows pair with zero hidden columns -> exact

    out = pl.pallas_call(
        functools.partial(_gemma_mlp_kernel, eps=eps),
        grid=(M_pad // tm, I_pad // ti),
        in_specs=[pl.BlockSpec((tm, H), lambda i, c: (i, 0)),
                  pl.BlockSpec((1, H), lambda i, c: (0, 0)),
                  pl.BlockSpec((H, ti), lambda i, c: (0, c)),
                  pl.BlockSpec((H, ti), lambda i, c: (0, c)),
                  pl.BlockSpec((ti, H), lambda i, c: (c, 0))],
        out_specs=pl.BlockSpec((tm, H), lambda i, c: (i, 0)),
        out_shape=jax.ShapeDtypeStruct((M_pad, H), jnp.bfloat16),
        scratch_shapes=[pltpu.VMEM((tm, H), jnp.bfloat16),     # cached normalized rows
                        pltpu.VMEM((tm, H), jnp.float32)],     # down-proj accumulator
        compiler_params=pltpu.CompilerParams(
            dimension_semantics=("parallel", "arbitrary"),
            vmem_limit_bytes=_VMEM_LIMIT),
    )(x2, norm_w.reshape(1, H), wg2, wu2, wd2)
    if M_pad != M:
        out = out[:M]
    return out.reshape(B, S, H)


# ----------------------------------------------------------------------------
# RoPE kernels (applied once, outside the attention kv loop)
# ----------------------------------------------------------------------------
def _rope_q_kernel(q_ref, cos_ref, sin_ref, o_ref, *, scale):
    q = q_ref[0, 0].astype(jnp.float32)            # (tq, hd)
    cos = cos_ref[0].astype(jnp.float32)
    sin = sin_ref[0].astype(jnp.float32)
    d2 = q.shape[-1] // 2
    rot = jnp.concatenate([-q[:, d2:], q[:, :d2]], axis=-1)
    # Softmax scale folded in here so the attention inner loop does q @ k^T only.
    o_ref[0, 0] = ((q * cos + rot * sin) * scale).astype(o_ref.dtype)


def _rope_kt_kernel(kt_ref, cos_ref, sin_ref, o_ref):
    # K arrives already in (head_dim, seq) layout; rotate-half along the sublane axis.
    kt = kt_ref[0, 0].astype(jnp.float32)          # (hd, tkv)
    cos = cos_ref[0].astype(jnp.float32)
    sin = sin_ref[0].astype(jnp.float32)
    d2 = kt.shape[0] // 2
    rot = jnp.concatenate([-kt[d2:, :], kt[:d2, :]], axis=0)
    o_ref[0, 0] = (kt * cos + rot * sin).astype(o_ref.dtype)


def rope_rotate_q(q, cos, sin, scale, *, tq_target=256):
    B, H, S, D = q.shape
    tq = _pick_tile(S, tq_target, 8)
    return pl.pallas_call(
        functools.partial(_rope_q_kernel, scale=scale),
        grid=(B, H, S // tq),
        in_specs=[pl.BlockSpec((1, 1, tq, D), lambda b, h, i: (b, h, i, 0)),
                  pl.BlockSpec((1, tq, D), lambda b, h, i: (b, i, 0)),
                  pl.BlockSpec((1, tq, D), lambda b, h, i: (b, i, 0))],
        out_specs=pl.BlockSpec((1, 1, tq, D), lambda b, h, i: (b, h, i, 0)),
        out_shape=jax.ShapeDtypeStruct((B, H, S, D), jnp.bfloat16),
        compiler_params=pltpu.CompilerParams(
            dimension_semantics=("parallel", "parallel", "parallel"),
            vmem_limit_bytes=_VMEM_LIMIT),
    )(q, cos, sin)


def rope_rotate_kt(kt, cos_t, sin_t, *, tkv_target=256):
    B, H, D, S = kt.shape
    tkv = _pick_tile(S, tkv_target, 128)
    return pl.pallas_call(
        _rope_kt_kernel,
        grid=(B, H, S // tkv),
        in_specs=[pl.BlockSpec((1, 1, D, tkv), lambda b, h, i: (b, h, 0, i)),
                  pl.BlockSpec((1, D, tkv), lambda b, h, i: (b, 0, i)),
                  pl.BlockSpec((1, D, tkv), lambda b, h, i: (b, 0, i))],
        out_specs=pl.BlockSpec((1, 1, D, tkv), lambda b, h, i: (b, h, 0, i)),
        out_shape=jax.ShapeDtypeStruct((B, H, D, S), jnp.bfloat16),
        compiler_params=pltpu.CompilerParams(
            dimension_semantics=("parallel", "parallel", "parallel"),
            vmem_limit_bytes=_VMEM_LIMIT),
    )(kt, cos_t, sin_t)


# ----------------------------------------------------------------------------
# Flash-style attention; K is fed pre-transposed ([B, Hkv, D, Skv]) so the score
# matmul is a natural [tq,D] x [D,tkv] MXU contraction.  GQA via index_map.
# ----------------------------------------------------------------------------
def _flash_attn_kernel(q_ref, kt_ref, v_ref, o_ref, m_ref, l_ref, acc_ref, *, scale):
    kv = pl.program_id(3)

    @pl.when(kv == 0)
    def _init():
        m_ref[...] = jnp.full_like(m_ref, -jnp.inf)
        l_ref[...] = jnp.zeros_like(l_ref)
        acc_ref[...] = jnp.zeros_like(acc_ref)

    q = q_ref[0, 0].astype(jnp.bfloat16)           # (tq, D), pre-roped/scaled for text
    kt = kt_ref[0, 0].astype(jnp.bfloat16)         # (D, tkv)
    s = jnp.dot(q, kt, preferred_element_type=jnp.float32)
    if scale != 1.0:
        s = s * scale
    # PaliGemma prefix prefill: the attention/causal mask is all zeros -> no masking.
    m_prev = m_ref[...]
    m_new = jnp.maximum(m_prev, jnp.max(s, axis=-1, keepdims=True))
    alpha = jnp.exp(m_prev - m_new)
    p = jnp.exp(s - m_new)
    l_ref[...] = alpha * l_ref[...] + jnp.sum(p, axis=-1, keepdims=True)
    acc_ref[...] = alpha * acc_ref[...] + jnp.dot(
        p.astype(jnp.bfloat16), v_ref[0, 0].astype(jnp.bfloat16),
        preferred_element_type=jnp.float32)
    m_ref[...] = m_new

    @pl.when(kv == pl.num_programs(3) - 1)
    def _finalize():
        # approx reciprocal runs on the EUP; tiny deviation from exact 1/l is acceptable.
        o_ref[0, 0] = (acc_ref[...]
                       * pl.reciprocal(l_ref[...], approx=True)).astype(o_ref.dtype)


def flash_attention(q, kt, v, scale, *, rep=1, tq_target=256, tkv_target=256):
    """q: [B, Hq, S, D]; kt: [B, Hkv, D, Skv]; v: [B, Hkv, Skv, D]; Hq == Hkv * rep."""
    B, Hq, S, D = q.shape
    Skv = v.shape[2]
    tq = _pick_tile(S, tq_target, 8)
    tkv = _pick_tile(Skv, tkv_target, 128)

    return pl.pallas_call(
        functools.partial(_flash_attn_kernel, scale=scale),
        grid=(B, Hq, S // tq, Skv // tkv),
        in_specs=[pl.BlockSpec((1, 1, tq, D), lambda b, h, i, j: (b, h, i, 0)),
                  pl.BlockSpec((1, 1, D, tkv), lambda b, h, i, j: (b, h // rep, 0, j)),
                  pl.BlockSpec((1, 1, tkv, D), lambda b, h, i, j: (b, h // rep, j, 0))],
        out_specs=pl.BlockSpec((1, 1, tq, D), lambda b, h, i, j: (b, h, i, 0)),
        out_shape=jax.ShapeDtypeStruct((B, Hq, S, D), jnp.bfloat16),
        scratch_shapes=[pltpu.VMEM((tq, 1), jnp.float32),
                        pltpu.VMEM((tq, 1), jnp.float32),
                        pltpu.VMEM((tq, D), jnp.float32)],
        compiler_params=pltpu.CompilerParams(
            dimension_semantics=("parallel", "parallel", "parallel", "arbitrary"),
            vmem_limit_bytes=_VMEM_LIMIT),
    )(q, kt, v)


# ----------------------------------------------------------------------------
# Text/image embedding merge (fuses image scaling and Gemma embed normalizer)
# ----------------------------------------------------------------------------
def _merge_kernel(emb_ref, img_ref, tmask_ref, imask_ref, o_ref, *, img_scale, embed_norm):
    emb = emb_ref[...].astype(jnp.float32)
    img = img_ref[...].astype(jnp.float32)
    merged = tmask_ref[...] * emb + imask_ref[...] * (img * img_scale)
    o_ref[...] = (merged * embed_norm).astype(o_ref.dtype)


def pallas_merge(inputs_embeds, image_full, text_mask, image_mask, *, img_scale, embed_norm):
    B, S, H = inputs_embeds.shape
    M = B * S
    tm = _pick_tile(M, 256, 8)
    out = pl.pallas_call(
        functools.partial(_merge_kernel, img_scale=img_scale, embed_norm=embed_norm),
        grid=(M // tm,),
        in_specs=[pl.BlockSpec((tm, H), lambda i: (i, 0)),
                  pl.BlockSpec((tm, H), lambda i: (i, 0)),
                  pl.BlockSpec((tm, 1), lambda i: (i, 0)),
                  pl.BlockSpec((tm, 1), lambda i: (i, 0))],
        out_specs=pl.BlockSpec((tm, H), lambda i: (i, 0)),
        out_shape=jax.ShapeDtypeStruct((M, H), jnp.bfloat16),
        compiler_params=pltpu.CompilerParams(dimension_semantics=("parallel",),
                                             vmem_limit_bytes=_VMEM_LIMIT),
    )(inputs_embeds.reshape(M, H), image_full.reshape(M, H),
      text_mask.reshape(M, 1), image_mask.reshape(M, 1))
    return out.reshape(B, S, H)


# ----------------------------------------------------------------------------
# Parameter init (deterministic, synthetic; weights bf16, pre-transposed [K, N])
# ----------------------------------------------------------------------------
def _nrm(key, shape, dtype=jnp.float32):
    return (0.02 * jax.random.normal(key, shape, dtype=jnp.float32)).astype(dtype)


def init_vision_params(key, vc):
    P = (vc.image_size // vc.patch_size) ** 2
    hid, inter, C, ps = vc.hidden_size, vc.intermediate_size, vc.num_channels, vc.patch_size
    keys = jax.random.split(key, 2 + vc.num_hidden_layers)
    p = {
        # conv(kernel=stride=patch) == per-patch matmul; weight stored [C*ps*ps, hid]
        "patch_w": _nrm(keys[0], (C * ps * ps, hid), jnp.bfloat16),
        "patch_b": jnp.zeros((hid,), jnp.float32),
        "pos_emb": _nrm(keys[1], (P, hid), jnp.bfloat16),
        "post_ln_w": jnp.ones((hid,), jnp.float32),
        "post_ln_b": jnp.zeros((hid,), jnp.float32),
        "layers": [],
    }
    for i in range(vc.num_hidden_layers):
        lk = jax.random.split(keys[2 + i], 4)
        p["layers"].append({
            "ln1_w": jnp.ones((hid,), jnp.float32), "ln1_b": jnp.zeros((hid,), jnp.float32),
            "qkv_w": _nrm(lk[0], (hid, 3 * hid), jnp.bfloat16),
            "qkv_b": jnp.zeros((3 * hid,), jnp.float32),
            "o_w": _nrm(lk[1], (hid, hid), jnp.bfloat16),
            "o_b": jnp.zeros((hid,), jnp.float32),
            "ln2_w": jnp.ones((hid,), jnp.float32), "ln2_b": jnp.zeros((hid,), jnp.float32),
            "fc1_w": _nrm(lk[2], (hid, inter), jnp.bfloat16),
            "fc1_b": jnp.zeros((inter,), jnp.float32),
            "fc2_w": _nrm(lk[3], (inter, hid), jnp.bfloat16),
            "fc2_b": jnp.zeros((hid,), jnp.float32),
        })
    return p


def init_gemma_params(key, tc):
    keys = jax.random.split(key, 1 + tc.num_hidden_layers)
    H, hd = tc.hidden_size, tc.head_dim
    nh, nkv, I, V = (tc.num_attention_heads, tc.num_key_value_heads,
                     tc.intermediate_size, tc.vocab_size)
    embed = _nrm(keys[0], (V, H), jnp.bfloat16)
    lm_head = embed.T    # tied weights, pre-transposed [H, V] for lane-dense logits
    if V > 1024 and V % 1024 != 0:
        # Pre-pad the vocab axis once at init so the lm_head uses tn=1024 tiles
        # (257152 -> 258048 for the real model); padded logits are sliced off.
        lm_head = jnp.pad(lm_head, ((0, 0), (0, _round_up(V, 1024) - V)))
    p = {
        "embed": embed,            # [V, H] for the token-id gather
        "lm_head_w": lm_head,
        "vocab_size": V,
        "final_norm_w": jnp.zeros((H,), jnp.float32),
        "layers": [],
    }
    for i in range(tc.num_hidden_layers):
        lk = jax.random.split(keys[1 + i], 5)
        p["layers"].append({
            "in_ln_w": jnp.zeros((H,), jnp.float32),
            "qkv_w": _nrm(lk[0], (H, (nh + 2 * nkv) * hd), jnp.bfloat16),
            "o_w": _nrm(lk[1], (nh * hd, H), jnp.bfloat16),
            "post_ln_w": jnp.zeros((H,), jnp.float32),
            "gate_w": _nrm(lk[2], (H, I), jnp.bfloat16),
            "up_w": _nrm(lk[3], (H, I), jnp.bfloat16),
            "down_w": _nrm(lk[4], (I, H), jnp.bfloat16),
        })
    return p


# ----------------------------------------------------------------------------
# Model forward (glue in JAX, compute in Pallas)
# ----------------------------------------------------------------------------
def siglip_vision_forward(p, vc, pixel_values):
    B, C, Himg, Wimg = pixel_values.shape
    ps = vc.patch_size
    gh, gw = Himg // ps, Wimg // ps
    patches = pixel_values.reshape(B, C, gh, ps, gw, ps)
    patches = patches.transpose(0, 2, 4, 1, 3, 5).reshape(B, gh * gw, C * ps * ps)
    h = fused_linear(patches.astype(jnp.bfloat16), p["patch_w"], p["patch_b"])
    h = h + p["pos_emb"][None, :, :]

    nh = vc.num_attention_heads
    dh = vc.hidden_size // nh
    scale = dh ** -0.5
    Bv, S, hid = h.shape
    for lp in p["layers"]:
        resid = h
        # LayerNorm cached+fused into the (concatenated) QKV projection.
        qkv = fused_linear(h, lp["qkv_w"], lp["qkv_b"], norm="layer",
                           norm_w=lp["ln1_w"], norm_b=lp["ln1_b"], eps=vc.layer_norm_eps)
        q3, k3, v3 = jnp.split(qkv, 3, axis=-1)
        # TODO(synk): real SigLIP head_dim (72) is below 128 lanes; packing heads (or a
        # full-softmax vision attention) would lift MXU utilization further.
        q = q3.reshape(Bv, S, nh, dh).transpose(0, 2, 1, 3)
        kt = k3.reshape(Bv, S, nh, dh).transpose(0, 2, 3, 1)   # [B, nh, dh, S]: natural QK^T
        v = v3.reshape(Bv, S, nh, dh).transpose(0, 2, 1, 3)
        attn = flash_attention(q, kt, v, scale, rep=1)
        attn = attn.transpose(0, 2, 1, 3).reshape(Bv, S, hid)
        h = fused_linear(attn, lp["o_w"], lp["o_b"], residual=resid)

        resid = h
        x = fused_linear(h, lp["fc1_w"], lp["fc1_b"], norm="layer",
                         norm_w=lp["ln2_w"], norm_b=lp["ln2_b"],
                         activation="gelu_tanh", eps=vc.layer_norm_eps)
        h = fused_linear(x, lp["fc2_w"], lp["fc2_b"], residual=resid)

    return h  # post_layernorm is fused into the multimodal projector


def rope_cos_sin(position_ids, head_dim, theta):
    inv_freq = 1.0 / (theta ** (jnp.arange(0, head_dim, 2, dtype=jnp.float32) / head_dim))
    freqs = position_ids.astype(jnp.float32)[..., None] * inv_freq[None, None, :]
    emb = jnp.concatenate([freqs, freqs], axis=-1)          # [B, S, head_dim]
    return jnp.cos(emb), jnp.sin(emb)


def gemma_forward(p, tc, inputs_embeds, position_ids):
    B, S, H = inputs_embeds.shape
    nh, nkv, hd = tc.num_attention_heads, tc.num_key_value_heads, tc.head_dim
    rep = nh // nkv
    scale = hd ** -0.5
    cos, sin = rope_cos_sin(position_ids, hd, tc.rope_theta)   # [B, S, hd] f32
    cos_t = jnp.swapaxes(cos, 1, 2)                            # [B, hd, S] for K layout
    sin_t = jnp.swapaxes(sin, 1, 2)

    h = inputs_embeds  # Gemma embed normalizer already fused into the merge kernel

    for lp in p["layers"]:
        resid = h
        # RMSNorm cached+fused into the concatenated QKV projection.
        qkv = fused_linear(h, lp["qkv_w"], norm="rms", norm_w=lp["in_ln_w"],
                           eps=tc.rms_norm_eps)
        # TODO(synk): with head_dim % 128 == 0 these head split/merge relayouts could be
        # folded into the matmul/attention BlockSpecs; kept in glue for arbitrary head_dim.
        q = qkv[..., :nh * hd].reshape(B, S, nh, hd).transpose(0, 2, 1, 3)
        k = qkv[..., nh * hd:(nh + nkv) * hd].reshape(B, S, nkv, hd).transpose(0, 2, 3, 1)
        v = qkv[..., (nh + nkv) * hd:].reshape(B, S, nkv, hd).transpose(0, 2, 1, 3)
        # RoPE + softmax scale applied once, outside the attention kv loop; K kept in
        # [B, Hkv, hd, S] layout so attention never transposes in its inner loop.
        q = rope_rotate_q(q, cos, sin, scale)
        kt = rope_rotate_kt(k, cos_t, sin_t)
        attn = flash_attention(q, kt, v, 1.0, rep=rep)
        attn = attn.transpose(0, 2, 1, 3).reshape(B, S, nh * hd)
        h = fused_linear(attn, lp["o_w"], residual=resid)

        # Cached RMSNorm + gate/up/down MLP + residual in one intermediate-tiled kernel.
        h = gemma_mlp(h, lp["post_ln_w"], lp["gate_w"], lp["up_w"], lp["down_w"],
                      eps=tc.rms_norm_eps)

    # Final RMSNorm cached+fused into the (pre-padded, vocab-tiled) lm_head.
    # bf16 logits halve the very large HBM write; accumulation stays f32 in-kernel.
    logits = fused_linear(h, p["lm_head_w"], norm="rms", norm_w=p["final_norm_w"],
                          eps=tc.rms_norm_eps, out_dtype=jnp.bfloat16, tn_target=1024)
    if logits.shape[-1] != p["vocab_size"]:
        logits = logits[..., :p["vocab_size"]]
    return logits


class PaliGemmaForConditionalGeneration:
    def __init__(self, config: PaliGemmaConfig, key):
        self.config = config
        self.pad_token_id = config.pad_token_id if config.pad_token_id is not None else -1
        kv_, kp, kt = jax.random.split(key, 3)
        self.vision_params = init_vision_params(kv_, config.vision_config)
        self.proj_w = _nrm(kp, (config.vision_config.hidden_size,
                                config.vision_config.projection_dim), jnp.bfloat16)
        self.proj_b = jnp.zeros((config.vision_config.projection_dim,), jnp.float32)
        self.text_params = init_gemma_params(kt, config.text_config)

    def _merge_input_ids_with_image_features(self, image_features, inputs_embeds,
                                             input_ids, attention_mask):
        B, S = input_ids.shape
        H = inputs_embeds.shape[-1]
        n_img = image_features.shape[1]
        # TODO(synk): a general masked_scatter with arbitrary image-token positions is a
        # data-dependent scatter; PaliGemma places image tokens contiguously at the start
        # of the sequence, so a pad-to-seq placement is exact here.
        image_full = jnp.zeros((B, S, H), jnp.bfloat16).at[:, :n_img, :].set(
            image_features.astype(jnp.bfloat16))
        text_mask = ((input_ids != self.config.image_token_index)
                     & (input_ids != self.pad_token_id)).astype(jnp.float32)[..., None]
        image_mask = (input_ids == self.config.image_token_index
                      ).astype(jnp.float32)[..., None]
        img_scale = 1.0 / math.sqrt(self.config.hidden_size)
        embed_norm = math.sqrt(self.config.text_config.hidden_size)
        final_embedding = pallas_merge(inputs_embeds, image_full, text_mask, image_mask,
                                       img_scale=img_scale, embed_norm=embed_norm)
        # Prefill causal mask is all zeros (no masking) -> omitted downstream.
        position_ids = jnp.cumsum(attention_mask, axis=-1)
        position_ids = jnp.where(attention_mask == 0, 1, position_ids)
        return final_embedding, position_ids

    def forward(self, input_ids, pixel_values, attention_mask):
        # NOTE: the reference asserts attention_mask is all ones (unpadded prefix prefill);
        # that host-syncing assert stays out of the hot path here and no masking is applied.
        # TODO(synk): embedding lookup is a data-dependent gather; kept in JAX glue.
        inputs_embeds = jnp.take(self.text_params["embed"], input_ids, axis=0)
        vision_h = siglip_vision_forward(self.vision_params, self.config.vision_config,
                                         pixel_values.astype(jnp.float32))
        # SigLIP post_layernorm fused into the multimodal projector matmul.
        image_features = fused_linear(vision_h, self.proj_w, self.proj_b, norm="layer",
                                      norm_w=self.vision_params["post_ln_w"],
                                      norm_b=self.vision_params["post_ln_b"],
                                      eps=self.config.vision_config.layer_norm_eps)
        inputs_embeds, position_ids = self._merge_input_ids_with_image_features(
            image_features, inputs_embeds, input_ids, attention_mask)
        logits = gemma_forward(self.text_params, self.config.text_config,
                               inputs_embeds, position_ids)
        return {"logits": logits}


# ----------------------------------------------------------------------------
if __name__ == "__main__":
    vision_config = dict(hidden_size=32, intermediate_size=64, num_hidden_layers=2,
                         num_attention_heads=4, num_channels=3, image_size=16, patch_size=8)
    text_config = dict(vocab_size=128, hidden_size=32, intermediate_size=64,
                       num_hidden_layers=2, num_attention_heads=4, num_key_value_heads=2,
                       head_dim=8, rms_norm_eps=1e-6, rope_theta=10000.0)
    cfg = PaliGemmaConfig(vision_config=vision_config, text_config=text_config,
                          image_token_index=127, vocab_size=128, projection_dim=32,
                          hidden_size=32, pad_token_id=None)

    key = jax.random.PRNGKey(0)
    k_model, k_pix, k_tok = jax.random.split(key, 3)
    model = PaliGemmaForConditionalGeneration(cfg, k_model)

    B = 2
    n_img = cfg.text_config.num_image_tokens      # (16/8)^2 = 4
    n_text = 4
    S = n_img + n_text                            # 8

    pixel_values = jax.random.normal(k_pix, (B, cfg.vision_config.num_channels,
                                             cfg.vision_config.image_size,
                                             cfg.vision_config.image_size), dtype=jnp.float32)
    text_tokens = jax.random.randint(k_tok, (B, n_text), 1, 127, dtype=jnp.int32)
    image_tokens = jnp.full((B, n_img), cfg.image_token_index, dtype=jnp.int32)
    input_ids = jnp.concatenate([image_tokens, text_tokens], axis=1)
    attention_mask = jnp.ones((B, S), dtype=jnp.int32)

    out = model.forward(input_ids, pixel_values, attention_mask)
    logits = jax.block_until_ready(out["logits"])
    assert logits.shape == (B, S, cfg.vocab_size)
    assert bool(jnp.all(jnp.isfinite(logits)))
    print("KERNEL_OK")
</pallas_src>

<mosaic_0001>
module attributes {stable_mosaic.version = 11 : i64} {
  func.func @_fused_linear_kernel(%arg0: i32, %arg1: i32, %arg2: i32, %arg3: memref<8x192xbf16, #tpu.memory_space<vmem>>, %arg4: memref<192x32xbf16, #tpu.memory_space<vmem>>, %arg5: memref<1x32xf32, #tpu.memory_space<vmem>>, %arg6: memref<8x32xbf16, #tpu.memory_space<vmem>>) attributes {dimension_semantics = [#tpu.dimension_semantics<parallel>, #tpu.dimension_semantics<parallel>, #tpu.dimension_semantics<arbitrary>], iteration_bounds = array<i64: 1, 1, 1>, scalar_prefetch = 0 : i64, scratch_operands = 0 : i64, tpu.core_type = #tpu.core_type<tc>, window_params = [{transform_indices = @transform_0, window_bounds = array<i64: 8, 192>}, {transform_indices = @transform_1, window_bounds = array<i64: 192, 32>}, {transform_indices = @transform_2, window_bounds = array<i64: 1, 32>}, {transform_indices = @transform_3, window_bounds = array<i64: 8, 32>}]} {
    %c0 = arith.constant 0 : index
    %c0_0 = arith.constant 0 : index
    %0 = vector.load %arg3[%c0, %c0_0] : memref<8x192xbf16, #tpu.memory_space<vmem>>, vector<8x192xbf16>
    %c0_1 = arith.constant 0 : index
    %c0_2 = arith.constant 0 : index
    %1 = vector.load %arg4[%c0_1, %c0_2] : memref<192x32xbf16, #tpu.memory_space<vmem>>, vector<192x32xbf16>
    %cst = arith.constant dense<0.000000e+00> : vector<8x32xf32>
    %2 = tpu.matmul %0, %1, %cst {dimension_numbers = #tpu.dot_dimension_numbers<[1], [0], [0], [1], [0, 0, 1, 1], [], []>} : vector<8x192xbf16>, vector<192x32xbf16>, vector<8x32xf32> -> vector<8x32xf32>
    %c0_3 = arith.constant 0 : index
    %c0_4 = arith.constant 0 : index
    %3 = vector.load %arg5[%c0_3, %c0_4] : memref<1x32xf32, #tpu.memory_space<vmem>>, vector<1x32xf32>
    %4 = vector.broadcast %3 : vector<1x32xf32> to vector<8x32xf32>
    %5 = arith.addf %2, %4 : vector<8x32xf32>
    %6 = arith.truncf %5 : vector<8x32xf32> to vector<8x32xbf16>
    %c0_5 = arith.constant 0 : index
    %c0_6 = arith.constant 0 : index
    %7 = vector.load %arg6[%c0_5, %c0_6] : memref<8x32xbf16, #tpu.memory_space<vmem>>, vector<8x32xbf16>
    tpu.vector_store %arg6[%c0_5, %c0_6], %6 {strides = array<i32>} : memref<8x32xbf16, #tpu.memory_space<vmem>>, vector<8x32xbf16>,
    return
  }
  func.func @transform_0(%arg0: i32, %arg1: i32, %arg2: i32) -> (i32, i32) {
    %c0_i32 = arith.constant 0 : i32
    return %arg0, %arg2 : i32, i32
  }
  func.func @transform_1(%arg0: i32, %arg1: i32, %arg2: i32) -> (i32, i32) {
    %c0_i32 = arith.constant 0 : i32
    return %arg2, %arg1 : i32, i32
  }
  func.func @transform_2(%arg0: i32, %arg1: i32, %arg2: i32) -> (i32, i32) {
    %c0_i32 = arith.constant 0 : i32
    %c0_i32_0 = arith.constant 0 : i32
    return %c0_i32, %arg1 : i32, i32
  }
  func.func @transform_3(%arg0: i32, %arg1: i32, %arg2: i32) -> (i32, i32) {
    %c0_i32 = arith.constant 0 : i32
    return %arg0, %arg1 : i32, i32
  }
}

</mosaic_0001>

<llo_original>
// kernel: tpu_custom_call.1
$region0: #{tpu_custom_call.1}
  #allocation0 [shape = 'u32[]', space=smem, size = 0x4, offset = 0x4, fixed_abs, tag = 'smem constant byte address 0x4 - core index']
  #allocation1 [shape = 'u32[144,128]{1,0:T(1,128)}', space=vmem, size = 0x12000, scoped, tag = 'internal scratch']
  %s0 = inlined_call_operand.vmem [shape: bf16[8,192], index: 0, kind: input, shape index: {}]
  %s1 = inlined_call_operand.vmem [shape: bf16[192,32], index: 1, kind: input, shape index: {}]
  %s2 = inlined_call_operand.vmem [shape: f32[1,32], index: 2, kind: input, shape index: {}]
  %s3 = inlined_call_operand.hbm [shape: bf16[8,32], index: 3, kind: output, shape index: {}]
  %s4 = sld [smem:[#allocation0]]
  $region22: #{tpu_custom_call.1} parent=0
    _
  %s6 = ssub.s32 1, %s4
  %s7 = scalar_select 0, %s6, %s4
  $region1: #{tpu_custom_call.1} parent=0
    #allocation2 [shape = 'u8[2048]{0}', space=vmem, size = 0x800, scoped, tag = 'output window, operand 0, single buffered']
    #allocation3 [shape = 's32[1]{0}', space=sflag, size = 0x4, scoped, tag = 'scoped memory for tpu_custom_call.1']
    %8 = vsyncpa [#allocation3], 0
    // Predicated region
    $region2: #{tpu_custom_call.1} parent=1 // pred_check
      _
    $region3: #{tpu_custom_call.1} parent=1 // pred_check_branch
      %10 = sbr.rel (0) target = $region5
    $region4: #{tpu_custom_call.1} parent=1 // pred_region
      _
    $region5: #{tpu_custom_call.1} parent=1 // pred_fallthru
      _
    // Predicated region
    $region6: #{tpu_custom_call.1} parent=1 // pred_check
      _
    $region7: #{tpu_custom_call.1} parent=1 // pred_check_branch
      %12 = sbr.rel (0) target = $region9
    $region8: #{tpu_custom_call.1} parent=1 // pred_region
      _
    $region9: #{tpu_custom_call.1} parent=1 // pred_fallthru
      _
    // Predicated region
    $region10: #{tpu_custom_call.1} parent=1 // pred_check
      _
    $region11: #{tpu_custom_call.1} parent=1 // pred_check_branch
      %14 = sbr.rel (0) target = $region13
    $region12: #{tpu_custom_call.1} parent=1 // pred_region
      _
    $region13: #{tpu_custom_call.1} parent=1 // pred_fallthru
      _
    %v16 = vld [vmem:[%s0] sm:$0xff]
    %v17 = vld [vmem:[%s1] sm:$0xf]
    %v18 = vld [vmem:[%s1 + $0x4] sm:$0xf]
    %v19 = vld [vmem:[%s1 + $0x8] sm:$0xf]
    %v20 = vld [vmem:[%s1 + $0xc] sm:$0xf]
    %v21 = vld [vmem:[%s1 + $0x10] sm:$0xf]
    %v22 = vld [vmem:[%s1 + $0x14] sm:$0xf]
    %v23 = vld [vmem:[%s1 + $0x18] sm:$0xf]
    %v24 = vld [vmem:[%s1 + $0x1c] sm:$0xf]
    %v25 = vld [vmem:[%s1 + $0x20] sm:$0xf]
    %v26 = vld [vmem:[%s1 + $0x24] sm:$0xf]
    %v27 = vld [vmem:[%s1 + $0x28] sm:$0xf]
    %v28 = vld [vmem:[%s1 + $0x2c] sm:$0xf]
    %v29 = vld [vmem:[%s1 + $0x30] sm:$0xf]
    %v30 = vld [vmem:[%s1 + $0x34] sm:$0xf]
    %v31 = vld [vmem:[%s1 + $0x38] sm:$0xf]
    %v32 = vld [vmem:[%s1 + $0x3c] sm:$0xf]
    %v33 = vld [vmem:[%s1 + $0x40] sm:$0xf]
    %v34 = vld [vmem:[%s1 + $0x44] sm:$0xf]
    %v35 = vld [vmem:[%s1 + $0x48] sm:$0xf]
    %v36 = vld [vmem:[%s1 + $0x4c] sm:$0xf]
    %v37 = vld [vmem:[%s1 + $0x50] sm:$0xf]
    %v38 = vld [vmem:[%s1 + $0x54] sm:$0xf]
    %v39 = vld [vmem:[%s1 + $0x58] sm:$0xf]
    %v40 = vld [vmem:[%s1 + $0x5c] sm:$0xf]
    %v41 = vld [vmem:[%s2] sm:$0x1]
    %v43 = vlaneseq
    %v44 = vshrl.u32 %v43, 7
    %v45 = vsub.s32 0, %v44
    %v46 = vrot.slane %v41, %v45
    %v49 = vunpack.c.l.b16 %v16
    %v50 = vunpack.c.h.b16 %v16
    %v51 = vpack.c.b16 %v49, %v49
    %v52 = vpack.c.b16 %v50, %v50
    %v78 = vunpack.c.l.b16 %v17
    %v79 = vunpack.c.l.b16 %v18
    %v80 = vunpack.c.l.b16 %v19
    %v81 = vunpack.c.l.b16 %v20
    %v82 = vunpack.c.l.b16 %v21
    %v83 = vunpack.c.l.b16 %v22
    %v84 = vunpack.c.l.b16 %v23
    %v85 = vunpack.c.l.b16 %v24
    %v86 = vunpack.c.l.b16 %v25
    %v87 = vunpack.c.l.b16 %v26
    %v88 = vunpack.c.l.b16 %v27
    %v89 = vunpack.c.l.b16 %v28
    %v90 = vunpack.c.l.b16 %v29
    %v91 = vunpack.c.l.b16 %v30
    %v92 = vunpack.c.l.b16 %v31
    %v93 = vunpack.c.l.b16 %v32
    %v94 = vunpack.c.l.b16 %v33
    %v95 = vunpack.c.l.b16 %v34
    %v96 = vunpack.c.l.b16 %v35
    %v97 = vunpack.c.l.b16 %v36
    %v98 = vunpack.c.l.b16 %v37
    %v99 = vunpack.c.l.b16 %v38
    %v100 = vunpack.c.l.b16 %v39
    %v101 = vunpack.c.l.b16 %v40
    %v102 = vpack.c.b16 %v79, %v78
    %v103 = vpack.c.b16 %v81, %v80
    %v104 = vpack.c.b16 %v83, %v82
    %v105 = vpack.c.b16 %v85, %v84
    %v106 = vpack.c.b16 %v87, %v86
    %v107 = vpack.c.b16 %v89, %v88
    %v108 = vpack.c.b16 %v91, %v90
    %v109 = vpack.c.b16 %v93, %v92
    %v110 = vpack.c.b16 %v95, %v94
    %v111 = vpack.c.b16 %v97, %v96
    %v112 = vpack.c.b16 %v99, %v98
    %v113 = vpack.c.b16 %v101, %v100
    %vm126 = vcmask 523264
    %v128 = vsel %vm126, %v52, 0
    %130 = vmatprep.subr.bf16.mxu0 0
    %131 = vmatpush1.bf16.msra.mxu0 %v109
    %132 = vmatprep.subr.bf16.mxu0 0
    %133 = vmatpush1.bf16.msra.mxu0 %v108
    %134 = vmatprep.subr.bf16.mxu0 0
    %135 = vmatpush1.bf16.msra.mxu0 %v107
    %136 = vmatprep.subr.bf16.mxu0 0
    %137 = vmatpush1.bf16.msra.mxu0 %v106
    %138 = vmatprep.subr.bf16.mxu0 0
    %139 = vmatpush1.bf16.msra.mxu0 %v105
    %140 = vmatprep.subr.bf16.mxu0 0
    %141 = vmatpush1.bf16.msra.mxu0 %v104
    %142 = vmatprep.subr.bf16.mxu0 0
    %143 = vmatpush1.bf16.msra.mxu0 %v103
    %144 = vmatprep.subr.bf16.mxu0 0
    %145 = vmatpush1.bf16.msra.mxu0 %v102
    %146 = vmatprep.subr.bf16.mxu0 0
    %147 = vmatpush2.bf16.msra.mxu0 0
    %148 = vmatprep.subr.bf16.mxu0 0
    %149 = vmatpush2.bf16.msra.mxu0 0
    %150 = vmatprep.subr.bf16.mxu0 0
    %151 = vmatpush2.bf16.msra.mxu0 0
    %152 = vmatprep.subr.bf16.mxu0 0
    %153 = vmatpush2.bf16.msra.mxu0 0
    %154 = vmatprep.subr.bf16.mxu0 0
    %155 = vmatpush2.bf16.msra.mxu0 %v113
    %156 = vmatprep.subr.bf16.mxu0 0
    %157 = vmatpush2.bf16.msra.mxu0 %v112
    %158 = vmatprep.subr.bf16.mxu0 0
    %159 = vmatpush2.bf16.msra.mxu0 %v111
    %160 = vmatprep.subr.bf16.mxu0 0
    %161 = vmatpush2.bf16.msra.mxu0 %v110
    %162 = vmatprep.mubr.bf16.mxu0 %v128
    %163 = vmatmul.mubr.bf16.gmra.mxu0 %v51
    %v164 = vpop.f32.mrf.mxu0
    %v165 = vadd.f32 %v46, %v164
    %v166 = vpop.f32.mrf.mxu0
    %v167 = vpop.f32.mrf.mxu0
    %v168 = vpop.f32.mrf.mxu0
    %169 = vdwg.mxu0
    %v170 = vpack.c.bf16 %v165, %v165
    %vm171 = vcmask 257024
    %172 = vst.msk [vmem:[#allocation2] sm:$0xf] %vm171, %v170
    // Predicated region
    $region14: #{tpu_custom_call.1} parent=1 // pred_check
      _
    $region15: #{tpu_custom_call.1} parent=1 // pred_check_branch
      %174 = sbr.rel (0) target = $region17
    $region16: #{tpu_custom_call.1} parent=1 // pred_region
      %s176 = ssub.s32 64, 64
      %177 = vsyncadd [#allocation3], %s176
      %s179 = sshll.u32 [#allocation2], 4
      %s180 = int_to_ptr.vmem [resolvable:$true] %s179
      %182 = dma.vmem_to_hbm [thread:$0]  %s180, 64, %s3, [#allocation3]
    $region17: #{tpu_custom_call.1} parent=1 // pred_fallthru
      _
    // Predicated region
    $region18: #{tpu_custom_call.1} parent=1 // pred_check
      _
    $region19: #{tpu_custom_call.1} parent=1 // pred_check_branch
      %184 = sbr.rel (0) target = $region21
    $region20: #{tpu_custom_call.1} parent=1 // pred_region
      %185 = dma.done [#allocation3], 64
    $region21: #{tpu_custom_call.1} parent=1 // pred_fallthru
      _
    %186 = vsyncpa [#allocation3], 1

</llo_original>
